<compile_context>
chip_gen: v5e
topology: v5e:2x2
jax: 0.10.0
libtpu: 0.0.40
codegen_flags: <defaults>
</compile_context>

<pallas_src>
import functools

import jax
import jax.numpy as jnp
from jax import lax
from jax.experimental import pallas as pl
from jax.experimental.pallas import tpu as pltpu

LIF_TAU = 2.0
LIF_VTH = 1.0
BN_EPS = 1e-3
IN_EPS = 1e-3

_LANE = 128


def _round_up(x, m):
    return (x + m - 1) // m * m


def _pad_ch(c):
    return _round_up(c, _LANE)


@functools.lru_cache(maxsize=None)
def _vmem_budgets():
    """(vmem_limit_bytes, per-call double-buffered tile budget) per TPU generation."""
    limit, tile = 32 * 1024 * 1024, 12 * 1024 * 1024      # v7x-safe (64 MiB physical VMEM)
    try:
        get_info = getattr(pltpu, "get_tpu_info", None)
        if get_info is not None:
            cap = int(getattr(get_info(), "vmem_capacity_bytes", 0) or 0)
            if cap >= 96 * 1024 * 1024:                   # v5e / v6e: 128 MiB physical VMEM
                limit, tile = 64 * 1024 * 1024, 32 * 1024 * 1024
    except Exception:
        pass
    return limit, tile


def _cparams():
    return pltpu.CompilerParams(dimension_semantics=("parallel",),
                                vmem_limit_bytes=_vmem_budgets()[0])


def _choose_tm(M, row_bytes, max_tm=1024):
    # Largest row tile (pow2 multiple of 128) that fits the VMEM tile budget;
    # prefer >= 2 grid steps (both v7x TensorCores busy).  No M % tm == 0
    # requirement: callers round M up to Mp and slice the tail rows off.
    tile_budget = _vmem_budgets()[1]
    tm = max_tm
    while tm > 128 and 2 * tm * row_bytes > tile_budget:
        tm //= 2
    while tm > 128 and pl.cdiv(M, tm) < 2:
        tm //= 2
    return tm


# ------------------------------------------------------------------ kernels --

def _mm_bn_lif_kernel(x_ref, w_ref, s_ref, b_ref, o_ref):
    # 1x1 conv as matmul + folded (BN, 1/tau, v_th) affine + LIF spike.
    acc = jnp.dot(x_ref[...], w_ref[...], preferred_element_type=jnp.float32)
    y = acc * s_ref[...] + b_ref[...]
    o_ref[...] = jnp.where(y >= 0.0, 1.0, 0.0).astype(o_ref.dtype)


def _mm_bn_lif_affine_lif_kernel(x_ref, w_ref, s0_ref, b0_ref, s1_ref, b1_ref, o_ref):
    # SEWBottleneck: conv1(1x1)+BN+LIF, then norm1(BN)+sn1(LIF), fused.
    acc = jnp.dot(x_ref[...], w_ref[...], preferred_element_type=jnp.float32)
    spk = jnp.where(acc * s0_ref[...] + b0_ref[...] >= 0.0, 1.0, 0.0)
    y2 = spk * s1_ref[...] + b1_ref[...]
    o_ref[...] = jnp.where(y2 >= 0.0, 1.0, 0.0).astype(o_ref.dtype)


def _conv3x3_in_lif_res_kernel(xg_ref, idn_ref, w_ref, s_ref, b_ref, o_ref, *, H, W, Wp):
    # One SEWBottleneck tail per sample, entirely in VMEM:
    #   conv2 (3x3, pad=1) + BN + LIF  ->  InstanceNorm2d + sn2(LIF)  ->  + identity (SEW add)
    # xg_ref : (1, (H+4)*Wp, C)  halo-padded y1 spikes flattened with row pitch Wp
    #          (multiple of 8) plus one zero guard padded-row above and below.
    # idn_ref: (1, H*W, C)       identity spikes (x1) for the SEW shortcut.
    # o_ref  : (1, H*W, Co)
    P = (H + 2) * Wp
    n_rows = (H + 4) * Wp
    Co = o_ref.shape[-1]

    xg_bf = xg_ref[0]                                   # ((H+4)*Wp, C) bf16
    xg32 = xg_bf.astype(jnp.float32)
    # kw = 0 / 2 shifts realized as sublane rolls (XLU slot, otherwise idle here).
    # Rolls are done in f32 (32-bit rotate: portable Mosaic lowering) and cast back
    # to bf16 for the MXU.  Wrapped rows only ever land in border / pitch-pad output
    # positions that the interior crop below discards, so they never contaminate.
    shifted = (
        pltpu.roll(xg32, shift=1, axis=0).astype(jnp.bfloat16),          # view[q] = xg[q-1]
        xg_bf,                                                           # view[q] = xg[q]
        pltpu.roll(xg32, shift=n_rows - 1, axis=0).astype(jnp.bfloat16), # view[q] = xg[q+1]
    )

    acc = None
    for kh in range(3):
        base = kh * Wp                                  # multiple of 8: sublane-aligned slice
        for kw in range(3):
            patch = shifted[kw][base:base + P, :]
            d = jnp.dot(patch, w_ref[kh * 3 + kw], preferred_element_type=jnp.float32)
            acc = d if acc is None else acc + d

    spk = jnp.where(acc * s_ref[...] + b_ref[...] >= 0.0, 1.0, 0.0)      # conv2 BN+LIF (0/1)

    # Crop the (H+2, Wp) frame to the true (H, W) interior in VMEM (no HBM roundtrip).
    band = spk[Wp:(H + 1) * Wp, :].reshape(H, Wp, Co)[:, 1:W + 1, :].reshape(H * W, Co)

    # InstanceNorm2d (no affine, biased var) over spatial; spikes are 0/1 so
    # E[x^2] = E[x] and var = mean*(1-mean): single-pass statistics.
    mean = jnp.mean(band, axis=0, keepdims=True)                         # (1, Co)
    var = mean * (1.0 - mean)
    yn = (band - mean) * lax.rsqrt(var + IN_EPS)
    spk2 = jnp.where(yn >= LIF_TAU * LIF_VTH, 1.0, 0.0)                  # sn2 spike

    o_ref[0] = (spk2 + idn_ref[0].astype(jnp.float32)).astype(o_ref.dtype)


def _mm2_bn_lif_kernel(a_ref, b_ref, wa_ref, wb_ref, s_ref, t_ref, o_ref):
    # conv3 over cat(x1, x2) without materializing the concat: two K-halves.
    acc = jnp.dot(a_ref[...], wa_ref[...], preferred_element_type=jnp.float32)
    acc = acc + jnp.dot(b_ref[...], wb_ref[...], preferred_element_type=jnp.float32)
    y = acc * s_ref[...] + t_ref[...]
    o_ref[...] = jnp.where(y >= 0.0, 1.0, 0.0).astype(o_ref.dtype)


# ----------------------------------------------------------------- wrappers --

def fused_stem(xf, w, scale, shift, tm):
    Mp, Kp = xf.shape
    Cout = w.shape[1]
    return pl.pallas_call(
        _mm_bn_lif_kernel,
        out_shape=jax.ShapeDtypeStruct((Mp, Cout), jnp.bfloat16),
        grid_spec=pltpu.PrefetchScalarGridSpec(
            num_scalar_prefetch=0,
            grid=(Mp // tm,),
            in_specs=[
                pl.BlockSpec((tm, Kp), lambda i: (i, 0)),
                pl.BlockSpec((Kp, Cout), lambda i: (0, 0)),
                pl.BlockSpec((1, Cout), lambda i: (0, 0)),
                pl.BlockSpec((1, Cout), lambda i: (0, 0)),
            ],
            out_specs=pl.BlockSpec((tm, Cout), lambda i: (i, 0)),
        ),
        compiler_params=_cparams(),
    )(xf, w, scale, shift)


def bottleneck_conv1_norm1(x12, w, s0, b0, s1, b1, tm, h_p):
    Mp = x12.shape[0]
    return pl.pallas_call(
        _mm_bn_lif_affine_lif_kernel,
        out_shape=jax.ShapeDtypeStruct((Mp, h_p), jnp.bfloat16),
        grid_spec=pltpu.PrefetchScalarGridSpec(
            num_scalar_prefetch=0,
            grid=(Mp // tm,),
            in_specs=[
                pl.BlockSpec((tm, h_p), lambda i: (i, 0)),    # x1 = cols [0, h_p) of x12
                pl.BlockSpec((h_p, h_p), lambda i: (0, 0)),
                pl.BlockSpec((1, h_p), lambda i: (0, 0)),
                pl.BlockSpec((1, h_p), lambda i: (0, 0)),
                pl.BlockSpec((1, h_p), lambda i: (0, 0)),
                pl.BlockSpec((1, h_p), lambda i: (0, 0)),
            ],
            out_specs=pl.BlockSpec((tm, h_p), lambda i: (i, 0)),
        ),
        compiler_params=_cparams(),
    )(x12, w, s0, b0, s1, b1)


def conv2_innorm_residual(xg2, idn_src, w9, scale, shift, H, W, Wp, h_p):
    N = xg2.shape[0]
    HW = H * W
    kernel = functools.partial(_conv3x3_in_lif_res_kernel, H=H, W=W, Wp=Wp)
    return pl.pallas_call(
        kernel,
        out_shape=jax.ShapeDtypeStruct((N, HW, h_p), jnp.bfloat16),
        grid_spec=pltpu.PrefetchScalarGridSpec(
            num_scalar_prefetch=0,
            grid=(N,),
            in_specs=[
                pl.BlockSpec((1, (H + 4) * Wp, h_p), lambda n: (n, 0, 0)),
                pl.BlockSpec((1, HW, h_p), lambda n: (n, 0, 0)),   # identity = column block 0
                pl.BlockSpec((9, h_p, h_p), lambda n: (0, 0, 0)),
                pl.BlockSpec((1, h_p), lambda n: (0, 0)),
                pl.BlockSpec((1, h_p), lambda n: (0, 0)),
            ],
            out_specs=pl.BlockSpec((1, HW, h_p), lambda n: (n, 0, 0)),
        ),
        compiler_params=_cparams(),
    )(xg2, idn_src, w9, scale, shift)


def conv3_fused(x1n, x12, wa, wb, scale, shift, tm):
    Mp, h_p = x1n.shape
    cout_p = wa.shape[1]
    return pl.pallas_call(
        _mm2_bn_lif_kernel,
        out_shape=jax.ShapeDtypeStruct((Mp, cout_p), jnp.bfloat16),   # spikes: bf16-exact
        grid_spec=pltpu.PrefetchScalarGridSpec(
            num_scalar_prefetch=0,
            grid=(Mp // tm,),
            in_specs=[
                pl.BlockSpec((tm, h_p), lambda i: (i, 0)),    # bottleneck output x1
                pl.BlockSpec((tm, h_p), lambda i: (i, 1)),    # x2 = cols [h_p, 2*h_p) of x12
                pl.BlockSpec((h_p, cout_p), lambda i: (0, 0)),
                pl.BlockSpec((h_p, cout_p), lambda i: (0, 0)),
                pl.BlockSpec((1, cout_p), lambda i: (0, 0)),
                pl.BlockSpec((1, cout_p), lambda i: (0, 0)),
            ],
            out_specs=pl.BlockSpec((tm, cout_p), lambda i: (i, 0)),
        ),
        compiler_params=_cparams(),
    )(x1n, x12, wa, wb, scale, shift)


# ------------------------------------------------------------------- params --

def fold_bn_lif(gamma, beta, mean, var, c_pad, eps=BN_EPS):
    # Fold eval-mode BN and the LIF constants (1/tau, v_th) into one affine so
    # kernels only evaluate (y*scale + shift >= 0).  Padded channels get
    # scale=0, shift=-1 so they always emit spike=0.
    g = gamma / jnp.sqrt(var + eps)
    scale = g / LIF_TAU
    shift = (beta - mean * g) / LIF_TAU - LIF_VTH
    c = gamma.shape[0]
    scale_p = jnp.zeros((1, c_pad), jnp.float32).at[0, :c].set(scale)
    shift_p = jnp.full((1, c_pad), -1.0, jnp.float32).at[0, :c].set(shift)
    return scale_p, shift_p


def init_csp_params(key, in_channels, out_channels, expansion=0.5):
    hidden = int(out_channels * expansion)
    assert hidden >= 1
    cin_p, h_p, cout_p = _pad_ch(in_channels), _pad_ch(hidden), _pad_ch(out_channels)
    keys = jax.random.split(key, 12)

    def bn(k, c, cp):
        k1, k2, k3, k4 = jax.random.split(k, 4)
        gamma = 1.0 + 0.1 * jax.random.normal(k1, (c,))
        beta = 0.1 * jax.random.normal(k2, (c,))
        mean = 0.1 * jax.random.normal(k3, (c,))
        var = 1.0 + 0.1 * jnp.abs(jax.random.normal(k4, (c,)))
        return fold_bn_lif(gamma, beta, mean, var, cp)

    def conv_w(k, cin, cout, cin_pad, cout_pad, ksize=1, dtype=jnp.float32):
        fan_in = cin * ksize * ksize
        w = jax.random.normal(k, (ksize, ksize, cin, cout)) * (2.0 / jnp.sqrt(fan_in))
        wp = jnp.zeros((ksize, ksize, cin_pad, cout_pad), jnp.float32)
        wp = wp.at[:, :, :cin, :cout].set(w)
        if ksize == 1:
            return wp.reshape(cin_pad, cout_pad).astype(dtype)
        return wp.reshape(ksize * ksize, cin_pad, cout_pad).astype(dtype)

    p = {'hidden': hidden, 'out_channels': out_channels,
         'cin_p': cin_p, 'h_p': h_p, 'cout_p': cout_p}

    # Fused CSP stems (conv1 | conv2): one matmul on the input, bf16 weights
    # (native MXU input dtype; f32 accumulation inside the kernel).
    w1 = conv_w(keys[0], in_channels, hidden, cin_p, h_p)
    w2 = conv_w(keys[1], in_channels, hidden, cin_p, h_p)
    p['stem_w'] = jnp.concatenate([w1, w2], axis=1).astype(jnp.bfloat16)   # (cin_p, 2*h_p)
    s1, b1 = bn(keys[2], hidden, h_p)
    s2, b2 = bn(keys[3], hidden, h_p)
    p['stem_scale'] = jnp.concatenate([s1, s2], axis=1)
    p['stem_shift'] = jnp.concatenate([b1, b2], axis=1)

    # SEWBottleneck conv1(1x1)+BN and norm1 (both fused with their LIFs);
    # spike-fed matmuls run in bf16 (spikes are exactly 0/1).
    p['b1_w'] = conv_w(keys[4], hidden, hidden, h_p, h_p, dtype=jnp.bfloat16)
    p['b1_scale'], p['b1_shift'] = bn(keys[5], hidden, h_p)
    p['n1_scale'], p['n1_shift'] = bn(keys[6], hidden, h_p)

    # SEWBottleneck conv2 (3x3) + BN.
    p['b2_w9'] = conv_w(keys[7], hidden, hidden, h_p, h_p, ksize=3, dtype=jnp.bfloat16)
    p['b2_scale'], p['b2_shift'] = bn(keys[8], hidden, h_p)

    # conv3 over cat(x1, x2): split the K axis into the x1 / x2 halves so the
    # concat never needs to be materialized.
    w3 = jax.random.normal(keys[9], (2 * hidden, out_channels)) * (2.0 / jnp.sqrt(2 * hidden))
    wa = jnp.zeros((h_p, cout_p), jnp.float32).at[:hidden, :out_channels].set(w3[:hidden])
    wb = jnp.zeros((h_p, cout_p), jnp.float32).at[:hidden, :out_channels].set(w3[hidden:])
    p['c3_wa'] = wa.astype(jnp.bfloat16)
    p['c3_wb'] = wb.astype(jnp.bfloat16)
    p['c3_scale'], p['c3_shift'] = bn(keys[10], out_channels, cout_p)
    return p


# ------------------------------------------------------------------ forward --

def csp_layer_forward(x_nchw, p):
    N, Cin, H, W = x_nchw.shape
    out_channels = p['out_channels']
    cin_p, h_p, cout_p = p['cin_p'], p['h_p'], p['cout_p']
    HW = H * W
    M = N * HW

    # NCHW -> rows (M, cin_p) in bf16 (halves the stem's biggest HBM stream and
    # keeps the MXU on its native bf16 path; accumulation stays f32).
    x = jnp.transpose(x_nchw, (0, 2, 3, 1)).astype(jnp.bfloat16)
    xf = x.reshape(M, Cin)
    if cin_p > Cin:
        xf = jnp.pad(xf, ((0, 0), (0, cin_p - Cin)))

    # Row tile: round-up (tail-pad) tiling, no divisibility requirement on M.
    row_bytes = max(2 * cin_p + 2 * 2 * h_p,        # stem (bf16 in, bf16 out)
                    2 * h_p + 2 * h_p,              # bottleneck 1x1 (bf16)
                    2 * 2 * h_p + 2 * cout_p)       # conv3 (two bf16 ins, bf16 out)
    tm = _choose_tm(M, row_bytes)
    Mp = _round_up(M, tm)
    if Mp > M:
        xf = jnp.pad(xf, ((0, Mp - M), (0, 0)))     # pad rows never mix; sliced off at the end

    # 1. Fused CSP stems: x12[:, :h_p] = conv1(x) spikes, x12[:, h_p:] = conv2(x) spikes.
    x12 = fused_stem(xf, p['stem_w'], p['stem_scale'], p['stem_shift'], tm)

    # 2. SEWBottleneck conv1+BN+LIF then norm1+sn1, fused; reads the x1 column
    #    block of x12 directly through its BlockSpec (no slice, no copy).
    y1 = bottleneck_conv1_norm1(x12, p['b1_w'], p['b1_scale'], p['b1_shift'],
                                p['n1_scale'], p['n1_shift'], tm, h_p)

    # 3. conv2 (3x3) + BN + LIF + InstanceNorm + sn2 + SEW shortcut, fused per sample.
    #    One jnp.pad builds the halo + guard-row + pitch-padded flattened image:
    #    pitch Wp = round_up(W+2, 8) keeps every kh*Wp tap offset sublane-aligned.
    Wp = _round_up(W + 2, 8)
    y1_sp = (y1 if Mp == M else y1[:M]).reshape(N, H, W, h_p)
    xg = jnp.pad(y1_sp, ((0, 0), (2, 2), (1, Wp - W - 1), (0, 0)))     # (N, H+4, Wp, h_p)
    xg2 = xg.reshape(N, (H + 4) * Wp, h_p)
    # Identity (x1 spikes) read straight out of x12's first column block via BlockSpec.
    idn_src = (x12 if Mp == M else x12[:M]).reshape(N, HW, 2 * h_p)
    x1n3 = conv2_innorm_residual(xg2, idn_src, p['b2_w9'], p['b2_scale'],
                                 p['b2_shift'], H, W, Wp, h_p)         # (N, HW, h_p)
    # TODO(synk): for large H*W (and v7x 2-TC occupancy at small N), tile this per-sample
    # kernel over H row-bands with a 1-row halo and two-pass InstanceNorm statistics.

    # 4. conv3 on cat(x1_new, x2): two K-halves, the concat is never materialized.
    x1n = x1n3.reshape(M, h_p)
    if Mp > M:
        x1n = jnp.pad(x1n, ((0, Mp - M), (0, 0)))
    # TODO(synk): on v6e/v7x, alias x1_new into x12[:, :h_p] via input_output_aliases and run
    # conv3 as a single K=2*h_p matmul to match the 256-wide MXU / merge the input DMA streams.
    out = conv3_fused(x1n, x12, p['c3_wa'], p['c3_wb'],
                      p['c3_scale'], p['c3_shift'], tm)                # (Mp, cout_p) bf16

    out = out[:M, :out_channels].reshape(N, H, W, out_channels)
    # Transpose moves bf16 (half the bytes); f32 cast fuses with the transpose.
    return jnp.transpose(out, (0, 3, 1, 2)).astype(jnp.float32)        # back to NCHW


if __name__ == "__main__":
    key = jax.random.PRNGKey(0)
    kx, kp = jax.random.split(key)
    N, C, H, W = 2, 4, 16, 16
    x = 3.0 * jax.random.normal(kx, (N, C, H, W), dtype=jnp.float32)
    params = init_csp_params(kp, in_channels=C, out_channels=4, expansion=0.5)
    out = csp_layer_forward(x, params)
    jax.block_until_ready(out)
    assert out.shape == (N, 4, H, W)
    assert bool(jnp.all(jnp.isfinite(out)))
    assert bool(jnp.all((out == 0.0) | (out == 1.0)))   # final stage is an LIF spike train
    print("KERNEL_OK")
</pallas_src>

<mosaic_0001>
module attributes {stable_mosaic.version = 11 : i64} {
  func.func @_mm_bn_lif_kernel(%arg0: i32, %arg1: memref<256x128xbf16, #tpu.memory_space<vmem>>, %arg2: memref<128x256xbf16, #tpu.memory_space<vmem>>, %arg3: memref<1x256xf32, #tpu.memory_space<vmem>>, %arg4: memref<1x256xf32, #tpu.memory_space<vmem>>, %arg5: memref<256x256xbf16, #tpu.memory_space<vmem>>) attributes {dimension_semantics = [#tpu.dimension_semantics<parallel>], iteration_bounds = array<i64: 2>, scalar_prefetch = 0 : i64, scratch_operands = 0 : i64, tpu.core_type = #tpu.core_type<tc>, window_params = [{transform_indices = @transform_0, window_bounds = array<i64: 256, 128>}, {pipeline_mode = #tpu.pipeline_mode<synchronous>, transform_indices = @transform_1, window_bounds = array<i64: 128, 256>}, {pipeline_mode = #tpu.pipeline_mode<synchronous>, transform_indices = @transform_2, window_bounds = array<i64: 1, 256>}, {pipeline_mode = #tpu.pipeline_mode<synchronous>, transform_indices = @transform_3, window_bounds = array<i64: 1, 256>}, {transform_indices = @transform_4, window_bounds = array<i64: 256, 256>}]} {
    %c0 = arith.constant 0 : index
    %c0_0 = arith.constant 0 : index
    %0 = vector.load %arg1[%c0, %c0_0] : memref<256x128xbf16, #tpu.memory_space<vmem>>, vector<256x128xbf16>
    %c0_1 = arith.constant 0 : index
    %c0_2 = arith.constant 0 : index
    %1 = vector.load %arg2[%c0_1, %c0_2] : memref<128x256xbf16, #tpu.memory_space<vmem>>, vector<128x256xbf16>
    %cst = arith.constant dense<0.000000e+00> : vector<256x256xf32>
    %2 = tpu.matmul %0, %1, %cst {dimension_numbers = #tpu.dot_dimension_numbers<[1], [0], [0], [1], [0, 0, 1, 1], [], []>} : vector<256x128xbf16>, vector<128x256xbf16>, vector<256x256xf32> -> vector<256x256xf32>
    %c0_3 = arith.constant 0 : index
    %c0_4 = arith.constant 0 : index
    %3 = vector.load %arg3[%c0_3, %c0_4] : memref<1x256xf32, #tpu.memory_space<vmem>>, vector<1x256xf32>
    %4 = vector.broadcast %3 : vector<1x256xf32> to vector<256x256xf32>
    %5 = arith.mulf %2, %4 : vector<256x256xf32>
    %c0_5 = arith.constant 0 : index
    %c0_6 = arith.constant 0 : index
    %6 = vector.load %arg4[%c0_5, %c0_6] : memref<1x256xf32, #tpu.memory_space<vmem>>, vector<1x256xf32>
    %7 = vector.broadcast %6 : vector<1x256xf32> to vector<256x256xf32>
    %8 = arith.addf %5, %7 : vector<256x256xf32>
    %cst_7 = arith.constant 0.000000e+00 : f32
    %9 = vector.broadcast %cst_7 : f32 to vector<256x256xf32>
    %10 = arith.cmpf oge, %8, %9 : vector<256x256xf32>
    %cst_8 = arith.constant 1.000000e+00 : f32
    %cst_9 = arith.constant 0.000000e+00 : f32
    %11 = vector.broadcast %cst_8 : f32 to vector<256x256xf32>
    %12 = vector.broadcast %cst_9 : f32 to vector<256x256xf32>
    %13 = arith.select %10, %11, %12 : vector<256x256xi1>, vector<256x256xf32>
    %14 = arith.truncf %13 : vector<256x256xf32> to vector<256x256xbf16>
    %c0_10 = arith.constant 0 : index
    %c0_11 = arith.constant 0 : index
    %15 = vector.load %arg5[%c0_10, %c0_11] : memref<256x256xbf16, #tpu.memory_space<vmem>>, vector<256x256xbf16>
    tpu.vector_store %arg5[%c0_10, %c0_11], %14 {strides = array<i32>} : memref<256x256xbf16, #tpu.memory_space<vmem>>, vector<256x256xbf16>,
    return
  }
  func.func @transform_0(%arg0: i32) -> (i32, i32) {
    %c0_i32 = arith.constant 0 : i32
    %c0_i32_0 = arith.constant 0 : i32
    return %arg0, %c0_i32 : i32, i32
  }
  func.func @transform_1(%arg0: i32) -> (i32, i32) {
    %c0_i32 = arith.constant 0 : i32
    %c0_i32_0 = arith.constant 0 : i32
    %c0_i32_1 = arith.constant 0 : i32
    return %c0_i32, %c0_i32_0 : i32, i32
  }
  func.func @transform_2(%arg0: i32) -> (i32, i32) {
    %c0_i32 = arith.constant 0 : i32
    %c0_i32_0 = arith.constant 0 : i32
    %c0_i32_1 = arith.constant 0 : i32
    return %c0_i32, %c0_i32_0 : i32, i32
  }
  func.func @transform_3(%arg0: i32) -> (i32, i32) {
    %c0_i32 = arith.constant 0 : i32
    %c0_i32_0 = arith.constant 0 : i32
    %c0_i32_1 = arith.constant 0 : i32
    return %c0_i32, %c0_i32_0 : i32, i32
  }
  func.func @transform_4(%arg0: i32) -> (i32, i32) {
    %c0_i32 = arith.constant 0 : i32
    %c0_i32_0 = arith.constant 0 : i32
    return %arg0, %c0_i32 : i32, i32
  }
}

</mosaic_0001>

<llo_original>
// kernel: tpu_custom_call.1
$region0: #{tpu_custom_call.1}
  #allocation0 [shape = 'u32[]', space=smem, size = 0x4, offset = 0x4, fixed_abs, tag = 'smem constant byte address 0x4 - core index']
  #allocation1 [shape = 'u32[72,128]{1,0:T(1,128)}', space=vmem, size = 0x9000, scoped, tag = 'internal scratch']
  %s0 = inlined_call_operand.hbm [shape: bf16[512,128], index: 0, kind: input, shape index: {}]
  %s1 = inlined_call_operand.hbm [shape: bf16[128,256], index: 1, kind: input, shape index: {}]
  %s2 = inlined_call_operand.hbm [shape: f32[1,256], index: 2, kind: input, shape index: {}]
  %s3 = inlined_call_operand.vmem [shape: f32[1,256], index: 3, kind: input, shape index: {}]
  %s4 = inlined_call_operand.hbm [shape: bf16[512,256], index: 4, kind: output, shape index: {}]
  %s5 = sld [smem:[#allocation0]]
  $region61: #{tpu_custom_call.1} parent=0
    _
  %s7 = ssub.s32 1, %s5
  %s8 = scalar_select 0, %s7, %s5
  $region1: #{tpu_custom_call.1} parent=0
    #allocation2 [shape = 'u8[131072]{0}', space=vmem, size = 0x20000, scoped, tag = 'input window, operand 0']
    #allocation3 [shape = 's32[2]{0}', space=sflag, size = 0x8, scoped, tag = 'scoped memory for tpu_custom_call.1']
    #allocation4 [shape = 's32[2]{0}', space=sflag, size = 0x8, scoped, tag = 'scoped memory for tpu_custom_call.1']
    #allocation5 [shape = 'u8[65536]{0}', space=vmem, size = 0x10000, scoped, tag = 'input window, operand 1, single buffered']
    #allocation6 [shape = 's32[1]{0}', space=sflag, size = 0x4, scoped, tag = 'scoped memory for tpu_custom_call.1']
    #allocation7 [shape = 'u8[1024]{0}', space=vmem, size = 0x400, scoped, tag = 'input window, operand 2, single buffered']
    #allocation8 [shape = 'u8[262144]{0}', space=vmem, size = 0x40000, scoped, tag = 'output window, operand 0']
    %9 = vsyncpa [#allocation3], 0
    %s10 = scalar_lea.sflag [#allocation3], 1
    %11 = vsyncpa %s10, 0
    %12 = vsyncpa [#allocation6], 0
    %13 = vsyncpa [#allocation4], 0
    %s14 = scalar_lea.sflag [#allocation4], 1
    %15 = vsyncpa %s14, 0
    loop: start=0, step=1, limit=4
    $region2: #{tpu_custom_call.1} parent=1 // loop_pre_header
      _
    $region3: #{tpu_custom_call.1} parent=1 // loop_header
      %s17 = sphi 0, %s21
      %p18 = scmp.ge.s32.totalorder %s17, 4
      %s27 = sphi 0, %s29
      %s30 = sphi 0, %s27
      %s31 = sphi 0, %s30
      %s47 = sphi 0, %s31
      %s51 = sphi 0, %s51
      %s53 = sphi 0, %s51
      %s54 = sphi 0, %s53
      %s68 = sphi 0, %s54
      %s72 = sphi 0, %s72
      %s74 = sphi 0, %s72
      %s75 = sphi 0, %s74
      %s89 = sphi 0, %s75
      %s93 = sphi 0, %s93
      %s95 = sphi 0, %s93
      %s96 = sphi 0, %s95
      %s110 = sphi 0, %s96
      %s116 = sphi 0, %s118
      %s119 = sphi 0, %s116
      %s120 = sphi 0, %s119
      %s136 = sphi 0, %s120
    $region4: #{tpu_custom_call.1} parent=1 // loop_header_branch
      %20 = sbr.rel (%p18) target = $region8
    $region5: #{tpu_custom_call.1} parent=1 // loop_body
      %s22 = ssub.s32 %s17, 1
      %s23 = ssub.s32 %s17, 2
      %s24 = sadd.s32 %s17, 1
      %s25 = ssub.s32 %s17, %s24
      %p26 = scmp.eq.s32.totalorder %s25, 0
      %s28 = sadd.s32 %s27, 1
      %s29 = scalar_select %p26, %s27, %s28
      %p32 = pneg %p26
      %p33 = scmp.eq.s32.totalorder %s17, 1
      %p34 = por %p32, %p33
      %p35 = scmp.ne.s32.totalorder %s27, %s30
      %p36 = scmp.eq.s32.totalorder %s17, 0
      %p37 = por %p35, %p36
      %p38 = scmp.ne.s32.totalorder %s27, %s30
      %p39 = scmp.eq.s32.totalorder %s22, 1
      %p40 = por %p38, %p39
      %p41 = scmp.ne.s32.totalorder %s30, %s31
      %p42 = scmp.eq.s32.totalorder %s22, 0
      %p43 = por %p41, %p42
      %p44 = scmp.ne.s32.totalorder %s30, %s31
      %p45 = scmp.eq.s32.totalorder %s23, 1
      %p46 = por %p44, %p45
      %p48 = scmp.ne.s32.totalorder %s31, %s47
      %p49 = scmp.eq.s32.totalorder %s23, 0
      %p50 = por %p48, %p49
      %s52 = sadd.s32 %s51, 1
      %p55 = scmp.eq.s32.totalorder %s17, 1
      %p56 = scmp.ne.s32.totalorder %s51, %s53
      %p57 = scmp.eq.s32.totalorder %s17, 0
      %p58 = por %p56, %p57
      %p59 = scmp.ne.s32.totalorder %s51, %s53
      %p60 = scmp.eq.s32.totalorder %s22, 1
      %p61 = por %p59, %p60
      %p62 = scmp.ne.s32.totalorder %s53, %s54
      %p63 = scmp.eq.s32.totalorder %s22, 0
      %p64 = por %p62, %p63
      %p65 = scmp.ne.s32.totalorder %s53, %s54
      %p66 = scmp.eq.s32.totalorder %s23, 1
      %p67 = por %p65, %p66
      %p69 = scmp.ne.s32.totalorder %s54, %s68
      %p70 = scmp.eq.s32.totalorder %s23, 0
      %p71 = por %p69, %p70
      %s73 = sadd.s32 %s72, 1
      %p76 = scmp.eq.s32.totalorder %s17, 1
      %p77 = scmp.ne.s32.totalorder %s72, %s74
      %p78 = scmp.eq.s32.totalorder %s17, 0
      %p79 = por %p77, %p78
      %p80 = scmp.ne.s32.totalorder %s72, %s74
      %p81 = scmp.eq.s32.totalorder %s22, 1
      %p82 = por %p80, %p81
      %p83 = scmp.ne.s32.totalorder %s74, %s75
      %p84 = scmp.eq.s32.totalorder %s22, 0
      %p85 = por %p83, %p84
      %p86 = scmp.ne.s32.totalorder %s74, %s75
      %p87 = scmp.eq.s32.totalorder %s23, 1
      %p88 = por %p86, %p87
      %p90 = scmp.ne.s32.totalorder %s75, %s89
      %p91 = scmp.eq.s32.totalorder %s23, 0
      %p92 = por %p90, %p91
      %s94 = sadd.s32 %s93, 1
      %p97 = scmp.eq.s32.totalorder %s17, 1
      %p98 = scmp.ne.s32.totalorder %s93, %s95
      %p99 = scmp.eq.s32.totalorder %s17, 0
      %p100 = por %p98, %p99
      %p101 = scmp.ne.s32.totalorder %s93, %s95
      %p102 = scmp.eq.s32.totalorder %s22, 1
      %p103 = por %p101, %p102
      %p104 = scmp.ne.s32.totalorder %s95, %s96
      %p105 = scmp.eq.s32.totalorder %s22, 0
      %p106 = por %p104, %p105
      %p107 = scmp.ne.s32.totalorder %s95, %s96
      %p108 = scmp.eq.s32.totalorder %s23, 1
      %p109 = por %p107, %p108
      %p111 = scmp.ne.s32.totalorder %s96, %s110
      %p112 = scmp.eq.s32.totalorder %s23, 0
      %p113 = por %p111, %p112
      %s114 = ssub.s32 %s17, %s24
      %p115 = scmp.eq.s32.totalorder %s114, 0
      %s117 = sadd.s32 %s116, 1
      %s118 = scalar_select %p115, %s116, %s117
      %p121 = pneg %p115
      %p122 = scmp.eq.s32.totalorder %s17, 1
      %p123 = por %p121, %p122
      %p124 = scmp.ne.s32.totalorder %s116, %s119
      %p125 = scmp.eq.s32.totalorder %s17, 0
      %p126 = por %p124, %p125
      %p127 = scmp.ne.s32.totalorder %s116, %s119
      %p128 = scmp.eq.s32.totalorder %s22, 1
      %p129 = por %p127, %p128
      %p130 = scmp.ne.s32.totalorder %s119, %s120
      %p131 = scmp.eq.s32.totalorder %s22, 0
      %p132 = por %p130, %p131
      %p133 = scmp.ne.s32.totalorder %s119, %s120
      %p134 = scmp.eq.s32.totalorder %s23, 1
      %p135 = por %p133, %p134
      %p137 = scmp.ne.s32.totalorder %s120, %s136
      %p138 = scmp.eq.s32.totalorder %s23, 0
      %p139 = por %p137, %p138
      %p140 = scmp.le.s32.totalorder 1, %s17
      %p141 = scmp.lt.s32.totalorder %s17, 3
      %p142 = pnand %p140, %p141
      %p143 = pneg %p142
      // Predicated region
      $region9: #{tpu_custom_call.1} parent=5 // pred_check
        _
      $region10: #{tpu_custom_call.1} parent=5 // pred_check_branch
        %145 = sbr.rel (%p142) target = $region12
      $region11: #{tpu_custom_call.1} parent=5 // pred_region
        %s146 = ssub.s32 %s17, 1
        // Predicated region
        $region13: #{tpu_custom_call.1} parent=11 // pred_check
          %p147 = pneg %p64
        $region14: #{tpu_custom_call.1} parent=11 // pred_check_branch
          %149 = sbr.rel (%p147) target = $region16
        $region15: #{tpu_custom_call.1} parent=11 // pred_region
          %151 = vsyncadd [#allocation6], 0
          %s152 = sshll.u32 %s1, 4
          %s153 = int_to_ptr.hbm [resolvable:$true] %s152
          %s154 = sshll.u32 [#allocation5], 4
          %s155 = int_to_ptr.vmem [resolvable:$true] %s154
          %160 = dma.hbm_to_vmem [thread:$0]  %s153, 2048, %s155, [#allocation6], 128, 128, 8
        $region16: #{tpu_custom_call.1} parent=11 // pred_fallthru
          _
        // Predicated region
        $region17: #{tpu_custom_call.1} parent=11 // pred_check
          %p161 = pneg %p85
        $region18: #{tpu_custom_call.1} parent=11 // pred_check_branch
          %163 = sbr.rel (%p161) target = $region20
        $region19: #{tpu_custom_call.1} parent=11 // pred_region
          %165 = vsyncadd [#allocation6], 0
          %s167 = sshll.u32 %s2, 4
          %s168 = int_to_ptr.hbm [resolvable:$true] %s167
          %s169 = sshll.u32 [#allocation7], 4
          %s170 = int_to_ptr.vmem [resolvable:$true] %s169
          %172 = dma.hbm_to_vmem [thread:$0]  %s168, 32, %s170, [#allocation6]
        $region20: #{tpu_custom_call.1} parent=11 // pred_fallthru
          _
        // Predicated region
        $region21: #{tpu_custom_call.1} parent=11 // pred_check
          %p173 = pneg %p106
        $region22: #{tpu_custom_call.1} parent=11 // pred_check_branch
          %175 = sbr.rel (%p173) target = $region24
        $region23: #{tpu_custom_call.1} parent=11 // pred_region
          _
        $region24: #{tpu_custom_call.1} parent=11 // pred_fallthru
          _
      $region12: #{tpu_custom_call.1} parent=5 // pred_fallthru
        _
      %p176 = scmp.lt.s32.totalorder %s17, 2
      // Predicated region
      $region25: #{tpu_custom_call.1} parent=5 // pred_check
        %p177 = pneg %p176
      $region26: #{tpu_custom_call.1} parent=5 // pred_check_branch
        %179 = sbr.rel (%p177) target = $region28
      $region27: #{tpu_custom_call.1} parent=5 // pred_region
        // Predicated region
        $region29: #{tpu_custom_call.1} parent=27 // pred_check
          %p180 = pneg %p37
        $region30: #{tpu_custom_call.1} parent=27 // pred_check_branch
          %182 = sbr.rel (%p180) target = $region32
        $region31: #{tpu_custom_call.1} parent=27 // pred_region
          %s183 = sand.u32 %s27, 1
          %s184 = scalar_lea.sflag [#allocation3], %s183
          %s185 = sand.u32 %s27, 1
          %s186 = smul.addr %s185, 128
          %s187 = scalar_lea.vmem [#allocation2], %s186
          %s188 = smul.u32 32, %s17
          %190 = vsyncadd %s184, 0
          %s191 = smul.addr %s188, 4
          %s192 = scalar_lea.hbm %s0, %s191
          %s193 = sshll.u32 %s192, 4
          %s194 = int_to_ptr.hbm [resolvable:$true] %s193
          %s195 = sshll.u32 %s187, 4
          %s196 = int_to_ptr.vmem [resolvable:$true] %s195
          %201 = dma.hbm_to_vmem [thread:$0]  %s194, 2048, %s196, %s184, 64, 64, 4
        $region32: #{tpu_custom_call.1} parent=27 // pred_fallthru
          _
      $region28: #{tpu_custom_call.1} parent=5 // pred_fallthru
        _
      %p202 = scmp.le.s32.totalorder 1, %s17
      %p203 = scmp.lt.s32.totalorder %s17, 3
      %p204 = pnand %p202, %p203
      %p205 = pneg %p204
      // Predicated region
      $region33: #{tpu_custom_call.1} parent=5 // pred_check
        _
      $region34: #{tpu_custom_call.1} parent=5 // pred_check_branch
        %207 = sbr.rel (%p204) target = $region36
      $region35: #{tpu_custom_call.1} parent=5 // pred_region
        %s208 = ssub.s32 %s17, 1
        %s209 = sand.u32 %s30, 1
        %s210 = scalar_lea.sflag [#allocation3], %s209
        %s211 = sand.u32 %s30, 1
        %s212 = smul.addr %s211, 128
        %s213 = scalar_lea.vmem [#allocation2], %s212
        // Predicated region
        $region37: #{tpu_custom_call.1} parent=35 // pred_check
          %p214 = pneg %p43
        $region38: #{tpu_custom_call.1} parent=35 // pred_check_branch
          %216 = sbr.rel (%p214) target = $region40
        $region39: #{tpu_custom_call.1} parent=35 // pred_region
          %218 = dma.done %s210, 2048
        $region40: #{tpu_custom_call.1} parent=35 // pred_fallthru
          _
        // Predicated region
        $region41: #{tpu_custom_call.1} parent=35 // pred_check
          %p219 = pneg %p64
        $region42: #{tpu_custom_call.1} parent=35 // pred_check_branch
          %221 = sbr.rel (%p219) target = $region44
        $region43: #{tpu_custom_call.1} parent=35 // pred_region
          %223 = dma.done [#allocation6], 2048
        $region44: #{tpu_custom_call.1} parent=35 // pred_fallthru
          _
        // Predicated region
        $region45: #{tpu_custom_call.1} parent=35 // pred_check
          %p224 = pneg %p85
        $region46: #{tpu_custom_call.1} parent=35 // pred_check_branch
          %226 = sbr.rel (%p224) target = $region48
        $region47: #{tpu_custom_call.1} parent=35 // pred_region
          %228 = dma.done [#allocation6], 32
        $region48: #{tpu_custom_call.1} parent=35 // pred_fallthru
          _
        %s229 = sand.u32 %s30, 1
        %s230 = scalar_lea.sflag [#allocation3], %s229
        %s231 = sand.u32 %s30, 1
        %s232 = smul.addr %s231, 128
        %s233 = scalar_lea.vmem [#allocation2], %s232
        %p234 = pneg %p43
        %p235 = pneg %p40
        %p236 = pneg %p64
        %p237 = pneg %p61
        %p238 = pneg %p85
        %p239 = pneg %p82
        %p240 = pneg %p106
        %p241 = pneg %p103
        %p242 = pneg %p132
        %p243 = pneg %p129
        %s244 = sand.u32 %s119, 1
        %s245 = scalar_lea.sflag [#allocation4], %s244
        %s246 = sand.u32 %s119, 1
        %s247 = smul.addr %s246, 256
        %s248 = scalar_lea.vmem [#allocation8], %s247
        %s249 = smul.u32 32, %s22
        %s250 = smul.u32 32, %s22
        %v251 = vld [vmem:[%s213] sm:$0xf]
        %v252 = vld [vmem:[%s213 + $0x4] sm:$0xf]
        %v253 = vld [vmem:[%s213 + $0x8] sm:$0xf]
        %v254 = vld [vmem:[%s213 + $0xc] sm:$0xf]
        %v255 = vld [vmem:[%s213 + $0x10] sm:$0xf]
        %v256 = vld [vmem:[%s213 + $0x14] sm:$0xf]
        %v257 = vld [vmem:[%s213 + $0x18] sm:$0xf]
        %v258 = vld [vmem:[%s213 + $0x1c] sm:$0xf]
        %v259 = vld [vmem:[%s213 + $0x20] sm:$0xf]
        %v260 = vld [vmem:[%s213 + $0x24] sm:$0xf]
        %v261 = vld [vmem:[%s213 + $0x28] sm:$0xf]
        %v262 = vld [vmem:[%s213 + $0x2c] sm:$0xf]
        %v263 = vld [vmem:[%s213 + $0x30] sm:$0xf]
        %v264 = vld [vmem:[%s213 + $0x34] sm:$0xf]
        %v265 = vld [vmem:[%s213 + $0x38] sm:$0xf]
        %v266 = vld [vmem:[%s213 + $0x3c] sm:$0xf]
        %v267 = vld [vmem:[%s213 + $0x40] sm:$0xf]
        %v268 = vld [vmem:[%s213 + $0x44] sm:$0xf]
        %v269 = vld [vmem:[%s213 + $0x48] sm:$0xf]
        %v270 = vld [vmem:[%s213 + $0x4c] sm:$0xf]
        %v271 = vld [vmem:[%s213 + $0x50] sm:$0xf]
        %v272 = vld [vmem:[%s213 + $0x54] sm:$0xf]
        %v273 = vld [vmem:[%s213 + $0x58] sm:$0xf]
        %v274 = vld [vmem:[%s213 + $0x5c] sm:$0xf]
        %v275 = vld [vmem:[%s213 + $0x60] sm:$0xf]
        %v276 = vld [vmem:[%s213 + $0x64] sm:$0xf]
        %v277 = vld [vmem:[%s213 + $0x68] sm:$0xf]
        %v278 = vld [vmem:[%s213 + $0x6c] sm:$0xf]
        %v279 = vld [vmem:[%s213 + $0x70] sm:$0xf]
        %v280 = vld [vmem:[%s213 + $0x74] sm:$0xf]
        %v281 = vld [vmem:[%s213 + $0x78] sm:$0xf]
        %v282 = vld [vmem:[%s213 + $0x7c] sm:$0xf]
        %v283 = vld [vmem:[#allocation5] sm:$0xff]
        %v284 = vld [vmem:[#allocation5 + $0x8] sm:$0xff]
        %v285 = vld [vmem:[#allocation5 + $0x10] sm:$0xff]
        %v286 = vld [vmem:[#allocation5 + $0x18] sm:$0xff]
        %v287 = vld [vmem:[#allocation5 + $0x20] sm:$0xff]
        %v288 = vld [vmem:[#allocation5 + $0x28] sm:$0xff]
        %v289 = vld [vmem:[#allocation5 + $0x30] sm:$0xff]
        %v290 = vld [vmem:[#allocation5 + $0x38] sm:$0xff]
        %v291 = vld [vmem:[#allocation5 + $0x40] sm:$0xff]
        %v292 = vld [vmem:[#allocation5 + $0x48] sm:$0xff]
        %v293 = vld [vmem:[#allocation5 + $0x50] sm:$0xff]
        %v294 = vld [vmem:[#allocation5 + $0x58] sm:$0xff]
        %v295 = vld [vmem:[#allocation5 + $0x60] sm:$0xff]
        %v296 = vld [vmem:[#allocation5 + $0x68] sm:$0xff]
        %v297 = vld [vmem:[#allocation5 + $0x70] sm:$0xff]
        %v298 = vld [vmem:[#allocation5 + $0x78] sm:$0xff]
        %v331 = vunpack.c.l.b16 %v251
        %v332 = vunpack.c.l.b16 %v252
        %v333 = vunpack.c.l.b16 %v253
        %v334 = vunpack.c.l.b16 %v254
        %v335 = vunpack.c.l.b16 %v255
        %v336 = vunpack.c.l.b16 %v256
        %v337 = vunpack.c.l.b16 %v257
        %v338 = vunpack.c.l.b16 %v258
        %v339 = vunpack.c.l.b16 %v259
        %v340 = vunpack.c.l.b16 %v260
        %v341 = vunpack.c.l.b16 %v261
        %v342 = vunpack.c.l.b16 %v262
        %v343 = vunpack.c.l.b16 %v263
        %v344 = vunpack.c.l.b16 %v264
        %v345 = vunpack.c.l.b16 %v265
        %v346 = vunpack.c.l.b16 %v266
        %v347 = vunpack.c.l.b16 %v267
        %v348 = vunpack.c.l.b16 %v268
        %v349 = vunpack.c.l.b16 %v269
        %v350 = vunpack.c.l.b16 %v270
        %v351 = vunpack.c.l.b16 %v271
        %v352 = vunpack.c.l.b16 %v272
        %v353 = vunpack.c.l.b16 %v273
        %v354 = vunpack.c.l.b16 %v274
        %v355 = vunpack.c.l.b16 %v275
        %v356 = vunpack.c.l.b16 %v276
        %v357 = vunpack.c.l.b16 %v277
        %v358 = vunpack.c.l.b16 %v278
        %v359 = vunpack.c.l.b16 %v279
        %v360 = vunpack.c.l.b16 %v280
        %v361 = vunpack.c.l.b16 %v281
        %v362 = vunpack.c.l.b16 %v282
        %v363 = vpack.c.b16 %v332, %v331
        %v364 = vpack.c.b16 %v334, %v333
        %v365 = vpack.c.b16 %v336, %v335
        %v366 = vpack.c.b16 %v338, %v337
        %v367 = vpack.c.b16 %v340, %v339
        %v368 = vpack.c.b16 %v342, %v341
        %v369 = vpack.c.b16 %v344, %v343
        %v370 = vpack.c.b16 %v346, %v345
        %v371 = vpack.c.b16 %v348, %v347
        %v372 = vpack.c.b16 %v350, %v349
        %v373 = vpack.c.b16 %v352, %v351
        %v374 = vpack.c.b16 %v354, %v353
        %v375 = vpack.c.b16 %v356, %v355
        %v376 = vpack.c.b16 %v358, %v357
        %v377 = vpack.c.b16 %v360, %v359
        %v378 = vpack.c.b16 %v362, %v361
        %v411 = vunpack.c.l.b16 %v283
        %v412 = vunpack.c.h.b16 %v283
        %v413 = vunpack.c.l.b16 %v284
        %v414 = vunpack.c.h.b16 %v284
        %v415 = vunpack.c.l.b16 %v285
        %v416 = vunpack.c.h.b16 %v285
        %v417 = vunpack.c.l.b16 %v286
        %v418 = vunpack.c.h.b16 %v286
        %v419 = vunpack.c.l.b16 %v287
        %v420 = vunpack.c.h.b16 %v287
        %v421 = vunpack.c.l.b16 %v288
        %v422 = vunpack.c.h.b16 %v288
        %v423 = vunpack.c.l.b16 %v289
        %v424 = vunpack.c.h.b16 %v289
        %v425 = vunpack.c.l.b16 %v290
        %v426 = vunpack.c.h.b16 %v290
        %v427 = vunpack.c.l.b16 %v291
        %v428 = vunpack.c.h.b16 %v291
        %v429 = vunpack.c.l.b16 %v292
        %v430 = vunpack.c.h.b16 %v292
        %v431 = vunpack.c.l.b16 %v293
        %v432 = vunpack.c.h.b16 %v293
        %v433 = vunpack.c.l.b16 %v294
        %v434 = vunpack.c.h.b16 %v294
        %v435 = vunpack.c.l.b16 %v295
        %v436 = vunpack.c.h.b16 %v295
        %v437 = vunpack.c.l.b16 %v296
        %v438 = vunpack.c.h.b16 %v296
        %v439 = vunpack.c.l.b16 %v297
        %v440 = vunpack.c.h.b16 %v297
        %v441 = vunpack.c.l.b16 %v298
        %v442 = vunpack.c.h.b16 %v298
        %v443 = vpack.c.b16 %v413, %v411
        %v444 = vpack.c.b16 %v414, %v412
        %v445 = vpack.c.b16 %v417, %v415
        %v446 = vpack.c.b16 %v418, %v416
        %v447 = vpack.c.b16 %v421, %v419
        %v448 = vpack.c.b16 %v422, %v420
        %v449 = vpack.c.b16 %v425, %v423
        %v450 = vpack.c.b16 %v426, %v424
        %v451 = vpack.c.b16 %v429, %v427
        %v452 = vpack.c.b16 %v430, %v428
        %v453 = vpack.c.b16 %v433, %v431
        %v454 = vpack.c.b16 %v434, %v432
        %v455 = vpack.c.b16 %v437, %v435
        %v456 = vpack.c.b16 %v438, %v436
        %v457 = vpack.c.b16 %v441, %v439
        %v458 = vpack.c.b16 %v442, %v440
        %475 = vmatpush.bf16.msra.mxu0 %v457
        %476 = vmatpush.bf16.msra.mxu0 %v455
        %477 = vmatpush.bf16.msra.mxu0 %v453
        %478 = vmatpush.bf16.msra.mxu0 %v451
        %479 = vmatpush.bf16.msra.mxu0 %v449
        %480 = vmatpush.bf16.msra.mxu0 %v447
        %481 = vmatpush.bf16.msra.mxu0 %v445
        %482 = vmatpush.bf16.msra.mxu0 %v443
        %483 = vmatmul.bf16.gmra.mxu0 %v363
        %v484 = vpop.f32.mrf.mxu0
        %v485 = vadd.f32 0.0, %v484
        %v486 = vpop.f32.mrf.mxu0
        %v487 = vadd.f32 0.0, %v486
        %488 = vmatmul.bf16.gmra.mxu0 %v364
        %v489 = vpop.f32.mrf.mxu0
        %v490 = vadd.f32 0.0, %v489
        %v491 = vpop.f32.mrf.mxu0
        %v492 = vadd.f32 0.0, %v491
        %493 = vmatmul.bf16.gmra.mxu0 %v365
        %v494 = vpop.f32.mrf.mxu0
        %v495 = vadd.f32 0.0, %v494
        %v496 = vpop.f32.mrf.mxu0
        %v497 = vadd.f32 0.0, %v496
        %498 = vmatmul.bf16.gmra.mxu0 %v366
        %v499 = vpop.f32.mrf.mxu0
        %v500 = vadd.f32 0.0, %v499
        %v501 = vpop.f32.mrf.mxu0
        %v502 = vadd.f32 0.0, %v501
        %503 = vmatmul.bf16.gmra.mxu0 %v367
        %v504 = vpop.f32.mrf.mxu0
        %v505 = vadd.f32 0.0, %v504
        %v506 = vpop.f32.mrf.mxu0
        %v507 = vadd.f32 0.0, %v506
        %508 = vmatmul.bf16.gmra.mxu0 %v368
        %v509 = vpop.f32.mrf.mxu0
        %v510 = vadd.f32 0.0, %v509
        %v511 = vpop.f32.mrf.mxu0
        %v512 = vadd.f32 0.0, %v511
        %513 = vmatmul.bf16.gmra.mxu0 %v369
        %v514 = vpop.f32.mrf.mxu0
        %v515 = vadd.f32 0.0, %v514
        %v516 = vpop.f32.mrf.mxu0
        %v517 = vadd.f32 0.0, %v516
        %518 = vmatmul.bf16.gmra.mxu0 %v370
        %v519 = vpop.f32.mrf.mxu0
        %v520 = vadd.f32 0.0, %v519
        %v521 = vpop.f32.mrf.mxu0
        %v522 = vadd.f32 0.0, %v521
        %523 = vmatmul.bf16.gmra.mxu0 %v371
        %v524 = vpop.f32.mrf.mxu0
        %v525 = vadd.f32 0.0, %v524
        %v526 = vpop.f32.mrf.mxu0
        %v527 = vadd.f32 0.0, %v526
        %528 = vmatmul.bf16.gmra.mxu0 %v372
        %v529 = vpop.f32.mrf.mxu0
        %v530 = vadd.f32 0.0, %v529
        %v531 = vpop.f32.mrf.mxu0
        %v532 = vadd.f32 0.0, %v531
        %533 = vmatmul.bf16.gmra.mxu0 %v373
        %v534 = vpop.f32.mrf.mxu0
        %v535 = vadd.f32 0.0, %v534
        %v536 = vpop.f32.mrf.mxu0
        %v537 = vadd.f32 0.0, %v536
        %538 = vmatmul.bf16.gmra.mxu0 %v374
        %v539 = vpop.f32.mrf.mxu0
        %v540 = vadd.f32 0.0, %v539
        %v541 = vpop.f32.mrf.mxu0
        %v542 = vadd.f32 0.0, %v541
        %543 = vmatmul.bf16.gmra.mxu0 %v375
        %v544 = vpop.f32.mrf.mxu0
        %v545 = vadd.f32 0.0, %v544
        %v546 = vpop.f32.mrf.mxu0
        %v547 = vadd.f32 0.0, %v546
        %548 = vmatmul.bf16.gmra.mxu0 %v376
        %v549 = vpop.f32.mrf.mxu0
        %v550 = vadd.f32 0.0, %v549
        %v551 = vpop.f32.mrf.mxu0
        %v552 = vadd.f32 0.0, %v551
        %553 = vmatmul.bf16.gmra.mxu0 %v377
        %v554 = vpop.f32.mrf.mxu0
        %v555 = vadd.f32 0.0, %v554
        %v556 = vpop.f32.mrf.mxu0
        %v557 = vadd.f32 0.0, %v556
        %558 = vmatmul.bf16.gmra.mxu0 %v378
        %v559 = vpop.f32.mrf.mxu0
        %v560 = vadd.f32 0.0, %v559
        %v561 = vpop.f32.mrf.mxu0
        %v562 = vadd.f32 0.0, %v561
        %563 = vdwg.mxu0
        %564 = vmatpush.bf16.msra.mxu0 %v458
        %565 = vmatpush.bf16.msra.mxu0 %v456
        %566 = vmatpush.bf16.msra.mxu0 %v454
        %567 = vmatpush.bf16.msra.mxu0 %v452
        %568 = vmatpush.bf16.msra.mxu0 %v450
        %569 = vmatpush.bf16.msra.mxu0 %v448
        %570 = vmatpush.bf16.msra.mxu0 %v446
        %571 = vmatpush.bf16.msra.mxu0 %v444
        %572 = vmatmul.bf16.gmra.mxu0 %v363
        %v573 = vpop.f32.mrf.mxu0
        %v574 = vadd.f32 0.0, %v573
        %v575 = vpop.f32.mrf.mxu0
        %v576 = vadd.f32 0.0, %v575
        %577 = vmatmul.bf16.gmra.mxu0 %v364
        %v578 = vpop.f32.mrf.mxu0
        %v579 = vadd.f32 0.0, %v578
        %v580 = vpop.f32.mrf.mxu0
        %v581 = vadd.f32 0.0, %v580
        %582 = vmatmul.bf16.gmra.mxu0 %v365
        %v583 = vpop.f32.mrf.mxu0
        %v584 = vadd.f32 0.0, %v583
        %v585 = vpop.f32.mrf.mxu0
        %v586 = vadd.f32 0.0, %v585
        %587 = vmatmul.bf16.gmra.mxu0 %v366
        %v588 = vpop.f32.mrf.mxu0
        %v589 = vadd.f32 0.0, %v588
        %v590 = vpop.f32.mrf.mxu0
        %v591 = vadd.f32 0.0, %v590
        %592 = vmatmul.bf16.gmra.mxu0 %v367
        %v593 = vpop.f32.mrf.mxu0
        %v594 = vadd.f32 0.0, %v593
        %v595 = vpop.f32.mrf.mxu0
        %v596 = vadd.f32 0.0, %v595
        %597 = vmatmul.bf16.gmra.mxu0 %v368
        %v598 = vpop.f32.mrf.mxu0
        %v599 = vadd.f32 0.0, %v598
        %v600 = vpop.f32.mrf.mxu0
        %v601 = vadd.f32 0.0, %v600
        %602 = vmatmul.bf16.gmra.mxu0 %v369
        %v603 = vpop.f32.mrf.mxu0
        %v604 = vadd.f32 0.0, %v603
        %v605 = vpop.f32.mrf.mxu0
        %v606 = vadd.f32 0.0, %v605
        %607 = vmatmul.bf16.gmra.mxu0 %v370
        %v608 = vpop.f32.mrf.mxu0
        %v609 = vadd.f32 0.0, %v608
        %v610 = vpop.f32.mrf.mxu0
        %v611 = vadd.f32 0.0, %v610
        %612 = vmatmul.bf16.gmra.mxu0 %v371
        %v613 = vpop.f32.mrf.mxu0
        %v614 = vadd.f32 0.0, %v613
        %v615 = vpop.f32.mrf.mxu0
        %v616 = vadd.f32 0.0, %v615
        %617 = vmatmul.bf16.gmra.mxu0 %v372
        %v618 = vpop.f32.mrf.mxu0
        %v619 = vadd.f32 0.0, %v618
        %v620 = vpop.f32.mrf.mxu0
        %v621 = vadd.f32 0.0, %v620
        %622 = vmatmul.bf16.gmra.mxu0 %v373
        %v623 = vpop.f32.mrf.mxu0
        %v624 = vadd.f32 0.0, %v623
        %v625 = vpop.f32.mrf.mxu0
        %v626 = vadd.f32 0.0, %v625
        %627 = vmatmul.bf16.gmra.mxu0 %v374
        %v628 = vpop.f32.mrf.mxu0
        %v629 = vadd.f32 0.0, %v628
        %v630 = vpop.f32.mrf.mxu0
        %v631 = vadd.f32 0.0, %v630
        %632 = vmatmul.bf16.gmra.mxu0 %v375
        %v633 = vpop.f32.mrf.mxu0
        %v634 = vadd.f32 0.0, %v633
        %v635 = vpop.f32.mrf.mxu0
        %v636 = vadd.f32 0.0, %v635
        %637 = vmatmul.bf16.gmra.mxu0 %v376
        %v638 = vpop.f32.mrf.mxu0
        %v639 = vadd.f32 0.0, %v638
        %v640 = vpop.f32.mrf.mxu0
        %v641 = vadd.f32 0.0, %v640
        %642 = vmatmul.bf16.gmra.mxu0 %v377
        %v643 = vpop.f32.mrf.mxu0
        %v644 = vadd.f32 0.0, %v643
        %v645 = vpop.f32.mrf.mxu0
        %v646 = vadd.f32 0.0, %v645
        %647 = vmatmul.bf16.gmra.mxu0 %v378
        %v648 = vpop.f32.mrf.mxu0
        %v649 = vadd.f32 0.0, %v648
        %v650 = vpop.f32.mrf.mxu0
        %v651 = vadd.f32 0.0, %v650
        %652 = vdwg.mxu0
        %v653 = vld [vmem:[#allocation7] sm:$0x3]
        %v655 = vperm.slane %v653, 0
        %v656 = vperm.slane %v653, 1
        %v659 = vmul.f32 %v485, %v655
        %v660 = vmul.f32 %v574, %v656
        %v661 = vmul.f32 %v487, %v655
        %v662 = vmul.f32 %v576, %v656
        %v663 = vmul.f32 %v490, %v655
        %v664 = vmul.f32 %v579, %v656
        %v665 = vmul.f32 %v492, %v655
        %v666 = vmul.f32 %v581, %v656
        %v667 = vmul.f32 %v495, %v655
        %v668 = vmul.f32 %v584, %v656
        %v669 = vmul.f32 %v497, %v655
        %v670 = vmul.f32 %v586, %v656
        %v671 = vmul.f32 %v500, %v655
        %v672 = vmul.f32 %v589, %v656
        %v673 = vmul.f32 %v502, %v655
        %v674 = vmul.f32 %v591, %v656
        %v675 = vmul.f32 %v505, %v655
        %v676 = vmul.f32 %v594, %v656
        %v677 = vmul.f32 %v507, %v655
        %v678 = vmul.f32 %v596, %v656
        %v679 = vmul.f32 %v510, %v655
        %v680 = vmul.f32 %v599, %v656
        %v681 = vmul.f32 %v512, %v655
        %v682 = vmul.f32 %v601, %v656
        %v683 = vmul.f32 %v515, %v655
        %v684 = vmul.f32 %v604, %v656
        %v685 = vmul.f32 %v517, %v655
        %v686 = vmul.f32 %v606, %v656
        %v687 = vmul.f32 %v520, %v655
        %v688 = vmul.f32 %v609, %v656
        %v689 = vmul.f32 %v522, %v655
        %v690 = vmul.f32 %v611, %v656
        %v691 = vmul.f32 %v525, %v655
        %v692 = vmul.f32 %v614, %v656
        %v693 = vmul.f32 %v527, %v655
        %v694 = vmul.f32 %v616, %v656
        %v695 = vmul.f32 %v530, %v655
        %v696 = vmul.f32 %v619, %v656
        %v697 = vmul.f32 %v532, %v655
        %v698 = vmul.f32 %v621, %v656
        %v699 = vmul.f32 %v535, %v655
        %v700 = vmul.f32 %v624, %v656
        %v701 = vmul.f32 %v537, %v655
        %v702 = vmul.f32 %v626, %v656
        %v703 = vmul.f32 %v540, %v655
        %v704 = vmul.f32 %v629, %v656
        %v705 = vmul.f32 %v542, %v655
        %v706 = vmul.f32 %v631, %v656
        %v707 = vmul.f32 %v545, %v655
        %v708 = vmul.f32 %v634, %v656
        %v709 = vmul.f32 %v547, %v655
        %v710 = vmul.f32 %v636, %v656
        %v711 = vmul.f32 %v550, %v655
        %v712 = vmul.f32 %v639, %v656
        %v713 = vmul.f32 %v552, %v655
        %v714 = vmul.f32 %v641, %v656
        %v715 = vmul.f32 %v555, %v655
        %v716 = vmul.f32 %v644, %v656
        %v717 = vmul.f32 %v557, %v655
        %v718 = vmul.f32 %v646, %v656
        %v719 = vmul.f32 %v560, %v655
        %v720 = vmul.f32 %v649, %v656
        %v721 = vmul.f32 %v562, %v655
        %v722 = vmul.f32 %v651, %v656
        %v723 = vld [vmem:[%s3] sm:$0x3]
        %v725 = vperm.slane %v723, 0
        %v726 = vperm.slane %v723, 1
        %v729 = vadd.f32 %v659, %v725
        %v730 = vadd.f32 %v660, %v726
        %v731 = vadd.f32 %v661, %v725
        %v732 = vadd.f32 %v662, %v726
        %v733 = vadd.f32 %v663, %v725
        %v734 = vadd.f32 %v664, %v726
        %v735 = vadd.f32 %v665, %v725
        %v736 = vadd.f32 %v666, %v726
        %v737 = vadd.f32 %v667, %v725
        %v738 = vadd.f32 %v668, %v726
        %v739 = vadd.f32 %v669, %v725
        %v740 = vadd.f32 %v670, %v726
        %v741 = vadd.f32 %v671, %v725
        %v742 = vadd.f32 %v672, %v726
        %v743 = vadd.f32 %v673, %v725
        %v744 = vadd.f32 %v674, %v726
        %v745 = vadd.f32 %v675, %v725
        %v746 = vadd.f32 %v676, %v726
        %v747 = vadd.f32 %v677, %v725
        %v748 = vadd.f32 %v678, %v726
        %v749 = vadd.f32 %v679, %v725
        %v750 = vadd.f32 %v680, %v726
        %v751 = vadd.f32 %v681, %v725
        %v752 = vadd.f32 %v682, %v726
        %v753 = vadd.f32 %v683, %v725
        %v754 = vadd.f32 %v684, %v726
        %v755 = vadd.f32 %v685, %v725
        %v756 = vadd.f32 %v686, %v726
        %v757 = vadd.f32 %v687, %v725
        %v758 = vadd.f32 %v688, %v726
        %v759 = vadd.f32 %v689, %v725
        %v760 = vadd.f32 %v690, %v726
        %v761 = vadd.f32 %v691, %v725
        %v762 = vadd.f32 %v692, %v726
        %v763 = vadd.f32 %v693, %v725
        %v764 = vadd.f32 %v694, %v726
        %v765 = vadd.f32 %v695, %v725
        %v766 = vadd.f32 %v696, %v726
        %v767 = vadd.f32 %v697, %v725
        %v768 = vadd.f32 %v698, %v726
        %v769 = vadd.f32 %v699, %v725
        %v770 = vadd.f32 %v700, %v726
        %v771 = vadd.f32 %v701, %v725
        %v772 = vadd.f32 %v702, %v726
        %v773 = vadd.f32 %v703, %v725
        %v774 = vadd.f32 %v704, %v726
        %v775 = vadd.f32 %v705, %v725
        %v776 = vadd.f32 %v706, %v726
        %v777 = vadd.f32 %v707, %v725
        %v778 = vadd.f32 %v708, %v726
        %v779 = vadd.f32 %v709, %v725
        %v780 = vadd.f32 %v710, %v726
        %v781 = vadd.f32 %v711, %v725
        %v782 = vadd.f32 %v712, %v726
        %v783 = vadd.f32 %v713, %v725
        %v784 = vadd.f32 %v714, %v726
        %v785 = vadd.f32 %v715, %v725
        %v786 = vadd.f32 %v716, %v726
        %v787 = vadd.f32 %v717, %v725
        %v788 = vadd.f32 %v718, %v726
        %v789 = vadd.f32 %v719, %v725
        %v790 = vadd.f32 %v720, %v726
        %v791 = vadd.f32 %v721, %v725
        %v792 = vadd.f32 %v722, %v726
        %vm793 = vcmp.ge.f32.partialorder %v729, 0.0
        %vm794 = vcmp.ge.f32.partialorder %v730, 0.0
        %vm795 = vcmp.ge.f32.partialorder %v731, 0.0
        %vm796 = vcmp.ge.f32.partialorder %v732, 0.0
        %vm797 = vcmp.ge.f32.partialorder %v733, 0.0
        %vm798 = vcmp.ge.f32.partialorder %v734, 0.0
        %vm799 = vcmp.ge.f32.partialorder %v735, 0.0
        %vm800 = vcmp.ge.f32.partialorder %v736, 0.0
        %vm801 = vcmp.ge.f32.partialorder %v737, 0.0
        %vm802 = vcmp.ge.f32.partialorder %v738, 0.0
        %vm803 = vcmp.ge.f32.partialorder %v739, 0.0
        %vm804 = vcmp.ge.f32.partialorder %v740, 0.0
        %vm805 = vcmp.ge.f32.partialorder %v741, 0.0
        %vm806 = vcmp.ge.f32.partialorder %v742, 0.0
        %vm807 = vcmp.ge.f32.partialorder %v743, 0.0
        %vm808 = vcmp.ge.f32.partialorder %v744, 0.0
        %vm809 = vcmp.ge.f32.partialorder %v745, 0.0
        %vm810 = vcmp.ge.f32.partialorder %v746, 0.0
        %vm811 = vcmp.ge.f32.partialorder %v747, 0.0
        %vm812 = vcmp.ge.f32.partialorder %v748, 0.0
        %vm813 = vcmp.ge.f32.partialorder %v749, 0.0
        %vm814 = vcmp.ge.f32.partialorder %v750, 0.0
        %vm815 = vcmp.ge.f32.partialorder %v751, 0.0
        %vm816 = vcmp.ge.f32.partialorder %v752, 0.0
        %vm817 = vcmp.ge.f32.partialorder %v753, 0.0
        %vm818 = vcmp.ge.f32.partialorder %v754, 0.0
        %vm819 = vcmp.ge.f32.partialorder %v755, 0.0
        %vm820 = vcmp.ge.f32.partialorder %v756, 0.0
        %vm821 = vcmp.ge.f32.partialorder %v757, 0.0
        %vm822 = vcmp.ge.f32.partialorder %v758, 0.0
        %vm823 = vcmp.ge.f32.partialorder %v759, 0.0
        %vm824 = vcmp.ge.f32.partialorder %v760, 0.0
        %vm825 = vcmp.ge.f32.partialorder %v761, 0.0
        %vm826 = vcmp.ge.f32.partialorder %v762, 0.0
        %vm827 = vcmp.ge.f32.partialorder %v763, 0.0
        %vm828 = vcmp.ge.f32.partialorder %v764, 0.0
        %vm829 = vcmp.ge.f32.partialorder %v765, 0.0
        %vm830 = vcmp.ge.f32.partialorder %v766, 0.0
        %vm831 = vcmp.ge.f32.partialorder %v767, 0.0
        %vm832 = vcmp.ge.f32.partialorder %v768, 0.0
        %vm833 = vcmp.ge.f32.partialorder %v769, 0.0
        %vm834 = vcmp.ge.f32.partialorder %v770, 0.0
        %vm835 = vcmp.ge.f32.partialorder %v771, 0.0
        %vm836 = vcmp.ge.f32.partialorder %v772, 0.0
        %vm837 = vcmp.ge.f32.partialorder %v773, 0.0
        %vm838 = vcmp.ge.f32.partialorder %v774, 0.0
        %vm839 = vcmp.ge.f32.partialorder %v775, 0.0
        %vm840 = vcmp.ge.f32.partialorder %v776, 0.0
        %vm841 = vcmp.ge.f32.partialorder %v777, 0.0
        %vm842 = vcmp.ge.f32.partialorder %v778, 0.0
        %vm843 = vcmp.ge.f32.partialorder %v779, 0.0
        %vm844 = vcmp.ge.f32.partialorder %v780, 0.0
        %vm845 = vcmp.ge.f32.partialorder %v781, 0.0
        %vm846 = vcmp.ge.f32.partialorder %v782, 0.0
        %vm847 = vcmp.ge.f32.partialorder %v783, 0.0
        %vm848 = vcmp.ge.f32.partialorder %v784, 0.0
        %vm849 = vcmp.ge.f32.partialorder %v785, 0.0
        %vm850 = vcmp.ge.f32.partialorder %v786, 0.0
        %vm851 = vcmp.ge.f32.partialorder %v787, 0.0
        %vm852 = vcmp.ge.f32.partialorder %v788, 0.0
        %vm853 = vcmp.ge.f32.partialorder %v789, 0.0
        %vm854 = vcmp.ge.f32.partialorder %v790, 0.0
        %vm855 = vcmp.ge.f32.partialorder %v791, 0.0
        %vm856 = vcmp.ge.f32.partialorder %v792, 0.0
        %v857 = vsel %vm793, 1.0, 0.0
        %v858 = vsel %vm794, 1.0, 0.0
        %v859 = vsel %vm795, 1.0, 0.0
        %v860 = vsel %vm796, 1.0, 0.0
        %v861 = vsel %vm797, 1.0, 0.0
        %v862 = vsel %vm798, 1.0, 0.0
        %v863 = vsel %vm799, 1.0, 0.0
        %v864 = vsel %vm800, 1.0, 0.0
        %v865 = vsel %vm801, 1.0, 0.0
        %v866 = vsel %vm802, 1.0, 0.0
        %v867 = vsel %vm803, 1.0, 0.0
        %v868 = vsel %vm804, 1.0, 0.0
        %v869 = vsel %vm805, 1.0, 0.0
        %v870 = vsel %vm806, 1.0, 0.0
        %v871 = vsel %vm807, 1.0, 0.0
        %v872 = vsel %vm808, 1.0, 0.0
        %v873 = vsel %vm809, 1.0, 0.0
        %v874 = vsel %vm810, 1.0, 0.0
        %v875 = vsel %vm811, 1.0, 0.0
        %v876 = vsel %vm812, 1.0, 0.0
        %v877 = vsel %vm813, 1.0, 0.0
        %v878 = vsel %vm814, 1.0, 0.0
        %v879 = vsel %vm815, 1.0, 0.0
        %v880 = vsel %vm816, 1.0, 0.0
        %v881 = vsel %vm817, 1.0, 0.0
        %v882 = vsel %vm818, 1.0, 0.0
        %v883 = vsel %vm819, 1.0, 0.0
        %v884 = vsel %vm820, 1.0, 0.0
        %v885 = vsel %vm821, 1.0, 0.0
        %v886 = vsel %vm822, 1.0, 0.0
        %v887 = vsel %vm823, 1.0, 0.0
        %v888 = vsel %vm824, 1.0, 0.0
        %v889 = vsel %vm825, 1.0, 0.0
        %v890 = vsel %vm826, 1.0, 0.0
        %v891 = vsel %vm827, 1.0, 0.0
        %v892 = vsel %vm828, 1.0, 0.0
        %v893 = vsel %vm829, 1.0, 0.0
        %v894 = vsel %vm830, 1.0, 0.0
        %v895 = vsel %vm831, 1.0, 0.0
        %v896 = vsel %vm832, 1.0, 0.0
        %v897 = vsel %vm833, 1.0, 0.0
        %v898 = vsel %vm834, 1.0, 0.0
        %v899 = vsel %vm835, 1.0, 0.0
        %v900 = vsel %vm836, 1.0, 0.0
        %v901 = vsel %vm837, 1.0, 0.0
        %v902 = vsel %vm838, 1.0, 0.0
        %v903 = vsel %vm839, 1.0, 0.0
        %v904 = vsel %vm840, 1.0, 0.0
        %v905 = vsel %vm841, 1.0, 0.0
        %v906 = vsel %vm842, 1.0, 0.0
        %v907 = vsel %vm843, 1.0, 0.0
        %v908 = vsel %vm844, 1.0, 0.0
        %v909 = vsel %vm845, 1.0, 0.0
        %v910 = vsel %vm846, 1.0, 0.0
        %v911 = vsel %vm847, 1.0, 0.0
        %v912 = vsel %vm848, 1.0, 0.0
        %v913 = vsel %vm849, 1.0, 0.0
        %v914 = vsel %vm850, 1.0, 0.0
        %v915 = vsel %vm851, 1.0, 0.0
        %v916 = vsel %vm852, 1.0, 0.0
        %v917 = vsel %vm853, 1.0, 0.0
        %v918 = vsel %vm854, 1.0, 0.0
        %v919 = vsel %vm855, 1.0, 0.0
        %v920 = vsel %vm856, 1.0, 0.0
        %v921 = vpack.c.bf16 %v858, %v857
        %v922 = vpack.c.bf16 %v860, %v859
        %v923 = vpack.c.bf16 %v862, %v861
        %v924 = vpack.c.bf16 %v864, %v863
        %v925 = vpack.c.bf16 %v866, %v865
        %v926 = vpack.c.bf16 %v868, %v867
        %v927 = vpack.c.bf16 %v870, %v869
        %v928 = vpack.c.bf16 %v872, %v871
        %v929 = vpack.c.bf16 %v874, %v873
        %v930 = vpack.c.bf16 %v876, %v875
        %v931 = vpack.c.bf16 %v878, %v877
        %v932 = vpack.c.bf16 %v880, %v879
        %v933 = vpack.c.bf16 %v882, %v881
        %v934 = vpack.c.bf16 %v884, %v883
        %v935 = vpack.c.bf16 %v886, %v885
        %v936 = vpack.c.bf16 %v888, %v887
        %v937 = vpack.c.bf16 %v890, %v889
        %v938 = vpack.c.bf16 %v892, %v891
        %v939 = vpack.c.bf16 %v894, %v893
        %v940 = vpack.c.bf16 %v896, %v895
        %v941 = vpack.c.bf16 %v898, %v897
        %v942 = vpack.c.bf16 %v900, %v899
        %v943 = vpack.c.bf16 %v902, %v901
        %v944 = vpack.c.bf16 %v904, %v903
        %v945 = vpack.c.bf16 %v906, %v905
        %v946 = vpack.c.bf16 %v908, %v907
        %v947 = vpack.c.bf16 %v910, %v909
        %v948 = vpack.c.bf16 %v912, %v911
        %v949 = vpack.c.bf16 %v914, %v913
        %v950 = vpack.c.bf16 %v916, %v915
        %v951 = vpack.c.bf16 %v918, %v917
        %v952 = vpack.c.bf16 %v920, %v919
        %953 = vst [vmem:[%s248] sm:$0xff] %v921
        %954 = vst [vmem:[%s248 + $0x8] sm:$0xff] %v922
        %955 = vst [vmem:[%s248 + $0x10] sm:$0xff] %v923
        %956 = vst [vmem:[%s248 + $0x18] sm:$0xff] %v924
        %957 = vst [vmem:[%s248 + $0x20] sm:$0xff] %v925
        %958 = vst [vmem:[%s248 + $0x28] sm:$0xff] %v926
        %959 = vst [vmem:[%s248 + $0x30] sm:$0xff] %v927
        %960 = vst [vmem:[%s248 + $0x38] sm:$0xff] %v928
        %961 = vst [vmem:[%s248 + $0x40] sm:$0xff] %v929
        %962 = vst [vmem:[%s248 + $0x48] sm:$0xff] %v930
        %963 = vst [vmem:[%s248 + $0x50] sm:$0xff] %v931
        %964 = vst [vmem:[%s248 + $0x58] sm:$0xff] %v932
        %965 = vst [vmem:[%s248 + $0x60] sm:$0xff] %v933
        %966 = vst [vmem:[%s248 + $0x68] sm:$0xff] %v934
        %967 = vst [vmem:[%s248 + $0x70] sm:$0xff] %v935
        %968 = vst [vmem:[%s248 + $0x78] sm:$0xff] %v936
        %969 = vst [vmem:[%s248 + $0x80] sm:$0xff] %v937
        %970 = vst [vmem:[%s248 + $0x88] sm:$0xff] %v938
        %971 = vst [vmem:[%s248 + $0x90] sm:$0xff] %v939
        %972 = vst [vmem:[%s248 + $0x98] sm:$0xff] %v940
        %973 = vst [vmem:[%s248 + $0xa0] sm:$0xff] %v941
        %974 = vst [vmem:[%s248 + $0xa8] sm:$0xff] %v942
        %975 = vst [vmem:[%s248 + $0xb0] sm:$0xff] %v943
        %976 = vst [vmem:[%s248 + $0xb8] sm:$0xff] %v944
        %977 = vst [vmem:[%s248 + $0xc0] sm:$0xff] %v945
        %978 = vst [vmem:[%s248 + $0xc8] sm:$0xff] %v946
        %979 = vst [vmem:[%s248 + $0xd0] sm:$0xff] %v947
        %980 = vst [vmem:[%s248 + $0xd8] sm:$0xff] %v948
        %981 = vst [vmem:[%s248 + $0xe0] sm:$0xff] %v949
        %982 = vst [vmem:[%s248 + $0xe8] sm:$0xff] %v950
        %983 = vst [vmem:[%s248 + $0xf0] sm:$0xff] %v951
        %984 = vst [vmem:[%s248 + $0xf8] sm:$0xff] %v952
        %s985 = sand.u32 %s119, 1
        %s986 = scalar_lea.sflag [#allocation4], %s985
        %s987 = sand.u32 %s119, 1
        %s988 = smul.addr %s987, 256
        %s989 = scalar_lea.vmem [#allocation8], %s988
        // Predicated region
        $region49: #{tpu_custom_call.1} parent=35 // pred_check
          %p990 = pneg %p129
        $region50: #{tpu_custom_call.1} parent=35 // pred_check_branch
          %992 = sbr.rel (%p990) target = $region52
        $region51: #{tpu_custom_call.1} parent=35 // pred_region
          %s993 = smul.u32 32, %s22
          %995 = vsyncadd %s986, 0
          %s996 = smul.addr %s993, 2
          %s997 = smul.addr %s996, 4
          %s998 = scalar_lea.hbm %s4, %s997
          %s999 = sshll.u32 %s989, 4
          %s1000 = int_to_ptr.vmem [resolvable:$true] %s999
          %s1001 = sshll.u32 %s998, 4
          %s1002 = int_to_ptr.hbm [resolvable:$true] %s1001
          %1007 = dma.vmem_to_hbm [thread:$0]  %s1000, 4096, %s1002, %s986, 128, 128, 8
        $region52: #{tpu_custom_call.1} parent=35 // pred_fallthru
          _
      $region36: #{tpu_custom_call.1} parent=5 // pred_fallthru
        _
      %p1008 = scmp.le.s32.totalorder 2, %s17
      // Predicated region
      $region53: #{tpu_custom_call.1} parent=5 // pred_check
        %p1009 = pneg %p1008
      $region54: #{tpu_custom_call.1} parent=5 // pred_check_branch
        %1011 = sbr.rel (%p1009) target = $region56
      $region55: #{tpu_custom_call.1} parent=5 // pred_region
        %s1012 = ssub.s32 %s17, 2
        // Predicated region
        $region57: #{tpu_custom_call.1} parent=55 // pred_check
          %p1013 = pneg %p135
        $region58: #{tpu_custom_call.1} parent=55 // pred_check_branch
          %1015 = sbr.rel (%p1013) target = $region60
        $region59: #{tpu_custom_call.1} parent=55 // pred_region
          %s1016 = sand.u32 %s120, 1
          %s1017 = scalar_lea.sflag [#allocation4], %s1016
          %s1018 = sand.u32 %s120, 1
          %s1019 = smul.addr %s1018, 256
          %s1020 = scalar_lea.vmem [#allocation8], %s1019
          %1022 = dma.done %s1017, 4096
        $region60: #{tpu_custom_call.1} parent=55 // pred_fallthru
          _
      $region56: #{tpu_custom_call.1} parent=5 // pred_fallthru
        _
    $region6: #{tpu_custom_call.1} parent=1 // loop_footer
      %s21 = sadd.s32 1, %s17
    $region7: #{tpu_custom_call.1} parent=1 // loop_footer_branch
      %16 = sbr.rel target = $region3
    $region8: #{tpu_custom_call.1} parent=1 // loop_exit
      _
    %1023 = vsyncpa [#allocation3], 1
    %s1024 = scalar_lea.sflag [#allocation3], 1
    %1025 = vsyncpa %s1024, 1
    %1026 = vsyncpa [#allocation6], 1
    %1027 = vsyncpa [#allocation4], 1
    %s1028 = scalar_lea.sflag [#allocation4], 1
    %1029 = vsyncpa %s1028, 1

</llo_original>
